<compile_context>
chip_gen: v7x
topology: tpu7x:2x2x1
jax: 0.10.0
libtpu: 0.0.40
codegen_flags: <defaults>
</compile_context>

<pallas_src>
import functools

import jax
import jax.numpy as jnp
from jax.experimental import pallas as pl
from jax.experimental.pallas import tpu as pltpu

_LANES = 128
_MAX_TILE_ROWS = 1024      # (1024,128) f32 tile = 512 KiB; safe on every generation
_NUM_SPLITS = 2            # 2-way parallel split for v7x megacore; harmless elsewhere


def _logistic_criterion_kernel(x_ref, t_ref, o_ref, *, numel, tile_rows,
                               steps_per_split):
    c = pl.program_id(0)   # parallel split (TensorCore shard on v7x)
    i = pl.program_id(1)   # sequential reduction steps within the split

    @pl.when(i == 0)
    def _():
        o_ref[...] = jnp.zeros_like(o_ref)

    x = x_ref[...].astype(jnp.float32)

    t = t_ref[...]
    if jnp.issubdtype(t.dtype, jnp.integer) or t.dtype == jnp.bool_:
        is_zero = t.astype(jnp.int32) == 0
    else:
        is_zero = t.astype(jnp.float32) == 0.0

    # loss = softplus(-x) + x * (t == 0)  ==  softplus(z) with z = x if t==0 else -x
    z = jnp.where(is_zero, x, -x)
    loss = jnp.maximum(z, 0.0) + jnp.log(1.0 + jnp.exp(-jnp.abs(z)))

    # Mask out padding rows / overhang blocks using the true element count.
    blk = c * steps_per_split + i                      # unclamped global block id
    row = jax.lax.broadcasted_iota(jnp.int32, (tile_rows, _LANES), 0)
    lane = jax.lax.broadcasted_iota(jnp.int32, (tile_rows, _LANES), 1)
    gidx = (blk * tile_rows + row) * _LANES + lane
    loss = jnp.where(gidx < numel, loss, 0.0)

    # Lane-parallel partial sums (pure VPU adds); cross-lane collapse deferred
    # to the wrapper's tiny final reduction.
    o_ref[...] += loss.reshape(-1, 8, _LANES).sum(axis=0)[None]


def logistic_criterion(inputs, target):
    """Pallas implementation of LogisticCriterion.forward. Returns an f32 scalar."""
    assert inputs.shape == target.shape, "boolean-mask indexing implies same shape"
    numel = inputs.size
    assert numel > 0

    if target.dtype == jnp.bool_:
        target = target.astype(jnp.int8)   # keep it 1 B/elem, no float materialization

    x = inputs.reshape(-1)
    t = target.reshape(-1)

    # Only pad (with zeros, masked in-kernel) when numel is not already a
    # multiple of one (8,128) vreg; the demo shape needs no pad at all.
    pad = (-numel) % (8 * _LANES)
    if pad:
        x = jnp.pad(x, (0, pad))
        t = jnp.pad(t, (0, pad))
    rows = (numel + pad) // _LANES

    tile_rows = min(_MAX_TILE_ROWS, rows)              # rows is a multiple of 8
    total_blocks = pl.cdiv(rows, tile_rows)
    steps_per_split = pl.cdiv(total_blocks, _NUM_SPLITS)
    last_block = total_blocks - 1

    x2 = x.reshape(rows, _LANES)
    t2 = t.reshape(rows, _LANES)

    def in_map(c, i):
        # Clamp so overhang iterations re-read the last block; their
        # contribution is zeroed by the in-kernel index mask.
        return (jnp.minimum(c * steps_per_split + i, last_block), 0)

    kernel = functools.partial(
        _logistic_criterion_kernel,
        numel=numel, tile_rows=tile_rows, steps_per_split=steps_per_split)

    partials = pl.pallas_call(
        kernel,
        out_shape=jax.ShapeDtypeStruct((_NUM_SPLITS, 8, _LANES), jnp.float32),
        grid_spec=pltpu.PrefetchScalarGridSpec(
            num_scalar_prefetch=0,
            grid=(_NUM_SPLITS, steps_per_split),
            in_specs=[
                pl.BlockSpec((tile_rows, _LANES), in_map),
                pl.BlockSpec((tile_rows, _LANES), in_map),
            ],
            out_specs=pl.BlockSpec((1, 8, _LANES), lambda c, i: (c, 0, 0)),
        ),
        compiler_params=pltpu.CompilerParams(
            dimension_semantics=("parallel", "arbitrary"),
            vmem_limit_bytes=16 * 1024 * 1024,
        ),
    )(x2, t2)

    # Tiny (2*8*128 elements) final reduction + 1/numel normalization.
    return jnp.sum(partials) * (1.0 / numel)


def _reference(inputs, target):
    x = inputs.astype(jnp.float32)
    log_den = jnp.logaddexp(0.0, -x)                     # softplus(-x)
    losses = log_den + jnp.where(target == 0, x, 0.0)
    return jnp.sum(losses) / x.size


if __name__ == "__main__":
    key = jax.random.PRNGKey(0)
    kx, kt = jax.random.split(key)

    # Small logits tensor; target is a same-shaped 0/1 label tensor.
    shape = (2, 4, 16, 16)
    x = jax.random.normal(kx, shape, dtype=jnp.float32) * 2.0
    target = jax.random.bernoulli(kt, 0.5, shape)        # bool labels

    out = jax.block_until_ready(logistic_criterion(x, target))
    ref = _reference(x, target)
    assert jnp.allclose(out, ref, rtol=1e-4, atol=1e-6), (out, ref)

    print("KERNEL_OK")
</pallas_src>

<mosaic_0001>
module attributes {stable_mosaic.version = 11 : i64} {
  func.func @_logistic_criterion_kernel(%arg0: i32, %arg1: i32, %arg2: memref<16x128xf32, #tpu.memory_space<vmem>>, %arg3: memref<16x128xi8, #tpu.memory_space<vmem>>, %arg4: memref<1x8x128xf32, #tpu.memory_space<vmem>>) attributes {dimension_semantics = [#tpu.dimension_semantics<parallel>, #tpu.dimension_semantics<arbitrary>], iteration_bounds = array<i64: 2, 1>, scalar_prefetch = 0 : i64, scratch_operands = 0 : i64, tpu.core_type = #tpu.core_type<tc>, window_params = [{transform_indices = @transform_0, window_bounds = array<i64: 16, 128>}, {transform_indices = @transform_1, window_bounds = array<i64: 16, 128>}, {transform_indices = @transform_2, window_bounds = array<i64: 1, 8, 128>}]} {
    %c0_i32 = arith.constant 0 : i32
    %0 = arith.cmpi eq, %arg1, %c0_i32 : i32
    %1 = arith.extui %0 : i1 to i32
    %c0_i32_0 = arith.constant 0 : i32
    %2 = arith.cmpi ne, %1, %c0_i32_0 : i32
    scf.if %2 {
      %cst_16 = arith.constant 0.000000e+00 : f32
      %41 = vector.broadcast %cst_16 : f32 to vector<1x8x128xf32>
      %c0_17 = arith.constant 0 : index
      %c0_18 = arith.constant 0 : index
      %c0_19 = arith.constant 0 : index
      %42 = vector.load %arg4[%c0_17, %c0_18, %c0_19] : memref<1x8x128xf32, #tpu.memory_space<vmem>>, vector<1x8x128xf32>
      tpu.vector_store %arg4[%c0_17, %c0_18, %c0_19], %41 {strides = array<i32>} : memref<1x8x128xf32, #tpu.memory_space<vmem>>, vector<1x8x128xf32>,
    } else {
    }
    %c0 = arith.constant 0 : index
    %c0_1 = arith.constant 0 : index
    %3 = vector.load %arg2[%c0, %c0_1] : memref<16x128xf32, #tpu.memory_space<vmem>>, vector<16x128xf32>
    %c0_2 = arith.constant 0 : index
    %c0_3 = arith.constant 0 : index
    %4 = vector.load %arg3[%c0_2, %c0_3] : memref<16x128xi8, #tpu.memory_space<vmem>>, vector<16x128xi8>
    %5 = arith.extsi %4 : vector<16x128xi8> to vector<16x128xi32>
    %c0_i32_4 = arith.constant 0 : i32
    %6 = vector.broadcast %c0_i32_4 : i32 to vector<16x128xi32>
    %7 = arith.cmpi eq, %5, %6 : vector<16x128xi32>
    %cst = arith.constant 0.000000e+00 : f32
    %8 = vector.broadcast %cst : f32 to vector<16x128xf32>
    %9 = arith.subf %8, %3 : vector<16x128xf32>
    %10 = arith.select %7, %3, %9 : vector<16x128xi1>, vector<16x128xf32>
    %cst_5 = arith.constant 0.000000e+00 : f32
    %11 = vector.broadcast %cst_5 : f32 to vector<16x128xf32>
    %12 = arith.maximumf %10, %11 : vector<16x128xf32>
    %13 = math.absf %10 : vector<16x128xf32>
    %cst_6 = arith.constant 0.000000e+00 : f32
    %14 = vector.broadcast %cst_6 : f32 to vector<16x128xf32>
    %15 = arith.subf %14, %13 : vector<16x128xf32>
    %16 = math.exp %15 : vector<16x128xf32>
    %cst_7 = arith.constant 1.000000e+00 : f32
    %17 = vector.broadcast %cst_7 : f32 to vector<16x128xf32>
    %18 = arith.addf %17, %16 : vector<16x128xf32>
    %19 = math.log %18 : vector<16x128xf32>
    %20 = arith.addf %12, %19 : vector<16x128xf32>
    %c1_i32 = arith.constant 1 : i32
    %21 = arith.muli %arg0, %c1_i32 : i32
    %22 = arith.addi %21, %arg1 : i32
    %23 = tpu.iota {dimensions = array<i32: 0>} : vector<16x128xi32>
    %24 = tpu.iota {dimensions = array<i32: 1>} : vector<16x128xi32>
    %c16_i32 = arith.constant 16 : i32
    %25 = arith.muli %22, %c16_i32 : i32
    %26 = vector.broadcast %25 : i32 to vector<16x128xi32>
    %27 = arith.addi %26, %23 : vector<16x128xi32>
    %c128_i32 = arith.constant 128 : i32
    %28 = vector.broadcast %c128_i32 : i32 to vector<16x128xi32>
    %29 = arith.muli %27, %28 : vector<16x128xi32>
    %30 = arith.addi %29, %24 : vector<16x128xi32>
    %c2048_i32 = arith.constant 2048 : i32
    %31 = vector.broadcast %c2048_i32 : i32 to vector<16x128xi32>
    %32 = arith.cmpi slt, %30, %31 : vector<16x128xi32>
    %cst_8 = arith.constant 0.000000e+00 : f32
    %33 = vector.broadcast %cst_8 : f32 to vector<16x128xf32>
    %34 = arith.select %32, %20, %33 : vector<16x128xi1>, vector<16x128xf32>
    %c0_9 = arith.constant 0 : index
    %c0_10 = arith.constant 0 : index
    %c0_11 = arith.constant 0 : index
    %35 = vector.load %arg4[%c0_9, %c0_10, %c0_11] : memref<1x8x128xf32, #tpu.memory_space<vmem>>, vector<1x8x128xf32>
    %36 = vector.shape_cast %34 : vector<16x128xf32> to vector<2x8x128xf32>
    %cst_12 = arith.constant dense<0.000000e+00> : vector<8x128xf32>
    %37 = vector.multi_reduction <add>, %36, %cst_12 [0] : vector<2x8x128xf32> to vector<8x128xf32>
    %38 = vector.shape_cast %37 : vector<8x128xf32> to vector<1x8x128xf32>
    %39 = arith.addf %35, %38 : vector<1x8x128xf32>
    %c0_13 = arith.constant 0 : index
    %c0_14 = arith.constant 0 : index
    %c0_15 = arith.constant 0 : index
    %40 = vector.load %arg4[%c0_13, %c0_14, %c0_15] : memref<1x8x128xf32, #tpu.memory_space<vmem>>, vector<1x8x128xf32>
    tpu.vector_store %arg4[%c0_13, %c0_14, %c0_15], %39 {strides = array<i32>} : memref<1x8x128xf32, #tpu.memory_space<vmem>>, vector<1x8x128xf32>,
    return
  }
  func.func @transform_0(%arg0: i32, %arg1: i32) -> (i32, i32) {
    %c1_i32 = arith.constant 1 : i32
    %0 = arith.muli %arg0, %c1_i32 : i32
    %1 = arith.addi %0, %arg1 : i32
    %c0_i32 = arith.constant 0 : i32
    %2 = arith.minsi %1, %c0_i32 : i32
    %c0_i32_0 = arith.constant 0 : i32
    %c0_i32_1 = arith.constant 0 : i32
    return %2, %c0_i32_0 : i32, i32
  }
  func.func @transform_1(%arg0: i32, %arg1: i32) -> (i32, i32) {
    %c1_i32 = arith.constant 1 : i32
    %0 = arith.muli %arg0, %c1_i32 : i32
    %1 = arith.addi %0, %arg1 : i32
    %c0_i32 = arith.constant 0 : i32
    %2 = arith.minsi %1, %c0_i32 : i32
    %c0_i32_0 = arith.constant 0 : i32
    %c0_i32_1 = arith.constant 0 : i32
    return %2, %c0_i32_0 : i32, i32
  }
  func.func @transform_2(%arg0: i32, %arg1: i32) -> (i32, i32, i32) {
    %c0_i32 = arith.constant 0 : i32
    %c0_i32_0 = arith.constant 0 : i32
    %c0_i32_1 = arith.constant 0 : i32
    return %arg0, %c0_i32, %c0_i32_0 : i32, i32, i32
  }
}

</mosaic_0001>

<llo_original>
// kernel: tpu_custom_call.1
$region0: #{tpu_custom_call.1}
  #allocation0 [shape = 'u32[]', space=smem, size = 0x4, offset = 0x4, fixed_abs, tag = 'smem constant byte address 0x4 - core index']
  #allocation1 [shape = 'u32[144,128]{1,0:T(1,128)}', space=vmem, size = 0x12000, scoped, tag = 'internal scratch']
  %s0 = inlined_call_operand.hbm [shape: f32[16,128], index: 0, kind: input, shape index: {}]
  %s1 = inlined_call_operand.hbm [shape: s8[16,128], index: 1, kind: input, shape index: {}]
  %s2 = inlined_call_operand.hbm [shape: f32[2,8,128], index: 2, kind: output, shape index: {}]
  %s3 = sld [smem:[#allocation0]]
  $region53: #{tpu_custom_call.1} parent=0
    _
  %s5 = ssub.s32 1, %s3
  %s6 = scalar_select 0, %s5, %s3
  $region1: #{tpu_custom_call.1} parent=0
    #allocation2 [shape = 'u8[16384]{0}', space=vmem, size = 0x4000, scoped, tag = 'input window, operand 0']
    #allocation3 [shape = 's32[2]{0}', space=sflag, size = 0x8, scoped, tag = 'scoped memory for tpu_custom_call.1']
    #allocation4 [shape = 's32[2]{0}', space=sflag, size = 0x8, scoped, tag = 'scoped memory for tpu_custom_call.1']
    #allocation5 [shape = 'u8[4096]{0}', space=vmem, size = 0x1000, scoped, tag = 'input window, operand 1']
    #allocation6 [shape = 's32[2]{0}', space=sflag, size = 0x8, scoped, tag = 'scoped memory for tpu_custom_call.1']
    #allocation7 [shape = 'u8[8192]{0}', space=vmem, size = 0x2000, scoped, tag = 'output window, operand 0']
    %7 = vsyncpa [#allocation3], 0
    %s8 = scalar_lea.sflag [#allocation3], 1
    %9 = vsyncpa %s8, 0
    %10 = vsyncpa [#allocation6], 0
    %s11 = scalar_lea.sflag [#allocation6], 1
    %12 = vsyncpa %s11, 0
    %13 = vsyncpa [#allocation4], 0
    %s14 = scalar_lea.sflag [#allocation4], 1
    %15 = vsyncpa %s14, 0
    loop: start=0, step=1, limit=4
    $region2: #{tpu_custom_call.1} parent=1 // loop_pre_header
      _
    $region3: #{tpu_custom_call.1} parent=1 // loop_header
      %s17 = sphi 0, %s21
      %p18 = scmp.ge.s32.totalorder %s17, 4
      %s24 = sphi 0, %s36
      %s25 = sphi 0, %s32
      %s26 = sphi 0, %s24
      %s27 = sphi 0, %s25
      %s28 = sphi 0, %s26
      %s29 = sphi 0, %s27
      %s45 = sphi 0, %s47
      %s48 = sphi 0, %s45
      %s49 = sphi 0, %s48
      %s65 = sphi 0, %s49
      %s77 = sphi 0, %s79
      %s80 = sphi 0, %s77
      %s81 = sphi 0, %s80
      %s97 = sphi 0, %s81
      %s103 = sphi 0, %s105
      %s106 = sphi 0, %s103
      %s107 = sphi 0, %s106
      %s123 = sphi 0, %s107
    $region4: #{tpu_custom_call.1} parent=1 // loop_header_branch
      %20 = sbr.rel (%p18) target = $region8
    $region5: #{tpu_custom_call.1} parent=1 // loop_body
      %s22 = ssub.s32 %s17, 1
      %s23 = ssub.s32 %s17, 2
      %s30 = sadd.s32 1, %s25
      %p31 = scmp.ge.s32.totalorder %s30, 1
      %s32 = scalar_select %p31, 0, %s30
      %s33 = sadd.s32 1, %s24
      %s34 = scalar_select %p31, %s33, %s24
      %p35 = scmp.ge.s32.totalorder %s34, 2
      %s36 = scalar_select %p35, 0, %s34
      %s37 = sadd.s32 %s24, %s25
      %p38 = scmp.lt.s32.totalorder %s37, 0
      %s39 = scalar_select %p38, %s37, 0
      %s40 = sadd.s32 %s36, %s32
      %p41 = scmp.lt.s32.totalorder %s40, 0
      %s42 = scalar_select %p41, %s40, 0
      %s43 = ssub.s32 %s39, %s42
      %p44 = scmp.eq.s32.totalorder %s43, 0
      %s46 = sadd.s32 %s45, 1
      %s47 = scalar_select %p44, %s45, %s46
      %p50 = pneg %p44
      %p51 = scmp.eq.s32.totalorder %s17, 1
      %p52 = por %p50, %p51
      %p53 = scmp.ne.s32.totalorder %s45, %s48
      %p54 = scmp.eq.s32.totalorder %s17, 0
      %p55 = por %p53, %p54
      %p56 = scmp.ne.s32.totalorder %s45, %s48
      %p57 = scmp.eq.s32.totalorder %s22, 1
      %p58 = por %p56, %p57
      %p59 = scmp.ne.s32.totalorder %s48, %s49
      %p60 = scmp.eq.s32.totalorder %s22, 0
      %p61 = por %p59, %p60
      %p62 = scmp.ne.s32.totalorder %s48, %s49
      %p63 = scmp.eq.s32.totalorder %s23, 1
      %p64 = por %p62, %p63
      %p66 = scmp.ne.s32.totalorder %s49, %s65
      %p67 = scmp.eq.s32.totalorder %s23, 0
      %p68 = por %p66, %p67
      %s69 = sadd.s32 %s24, %s25
      %p70 = scmp.lt.s32.totalorder %s69, 0
      %s71 = scalar_select %p70, %s69, 0
      %s72 = sadd.s32 %s36, %s32
      %p73 = scmp.lt.s32.totalorder %s72, 0
      %s74 = scalar_select %p73, %s72, 0
      %s75 = ssub.s32 %s71, %s74
      %p76 = scmp.eq.s32.totalorder %s75, 0
      %s78 = sadd.s32 %s77, 1
      %s79 = scalar_select %p76, %s77, %s78
      %p82 = pneg %p76
      %p83 = scmp.eq.s32.totalorder %s17, 1
      %p84 = por %p82, %p83
      %p85 = scmp.ne.s32.totalorder %s77, %s80
      %p86 = scmp.eq.s32.totalorder %s17, 0
      %p87 = por %p85, %p86
      %p88 = scmp.ne.s32.totalorder %s77, %s80
      %p89 = scmp.eq.s32.totalorder %s22, 1
      %p90 = por %p88, %p89
      %p91 = scmp.ne.s32.totalorder %s80, %s81
      %p92 = scmp.eq.s32.totalorder %s22, 0
      %p93 = por %p91, %p92
      %p94 = scmp.ne.s32.totalorder %s80, %s81
      %p95 = scmp.eq.s32.totalorder %s23, 1
      %p96 = por %p94, %p95
      %p98 = scmp.ne.s32.totalorder %s81, %s97
      %p99 = scmp.eq.s32.totalorder %s23, 0
      %p100 = por %p98, %p99
      %s101 = ssub.s32 %s24, %s36
      %p102 = scmp.eq.s32.totalorder %s101, 0
      %s104 = sadd.s32 %s103, 1
      %s105 = scalar_select %p102, %s103, %s104
      %p108 = pneg %p102
      %p109 = scmp.eq.s32.totalorder %s17, 1
      %p110 = por %p108, %p109
      %p111 = scmp.ne.s32.totalorder %s103, %s106
      %p112 = scmp.eq.s32.totalorder %s17, 0
      %p113 = por %p111, %p112
      %p114 = scmp.ne.s32.totalorder %s103, %s106
      %p115 = scmp.eq.s32.totalorder %s22, 1
      %p116 = por %p114, %p115
      %p117 = scmp.ne.s32.totalorder %s106, %s107
      %p118 = scmp.eq.s32.totalorder %s22, 0
      %p119 = por %p117, %p118
      %p120 = scmp.ne.s32.totalorder %s106, %s107
      %p121 = scmp.eq.s32.totalorder %s23, 1
      %p122 = por %p120, %p121
      %p124 = scmp.ne.s32.totalorder %s107, %s123
      %p125 = scmp.eq.s32.totalorder %s23, 0
      %p126 = por %p124, %p125
      %p127 = scmp.le.s32.totalorder 1, %s17
      %p128 = scmp.lt.s32.totalorder %s17, 3
      %p129 = pnand %p127, %p128
      %p130 = pneg %p129
      // Predicated region
      $region9: #{tpu_custom_call.1} parent=5 // pred_check
        _
      $region10: #{tpu_custom_call.1} parent=5 // pred_check_branch
        %132 = sbr.rel (%p129) target = $region12
      $region11: #{tpu_custom_call.1} parent=5 // pred_region
        %s133 = ssub.s32 %s17, 1
      $region12: #{tpu_custom_call.1} parent=5 // pred_fallthru
        _
      %p134 = scmp.lt.s32.totalorder %s17, 2
      // Predicated region
      $region13: #{tpu_custom_call.1} parent=5 // pred_check
        %p135 = pneg %p134
      $region14: #{tpu_custom_call.1} parent=5 // pred_check_branch
        %137 = sbr.rel (%p135) target = $region16
      $region15: #{tpu_custom_call.1} parent=5 // pred_region
        // Predicated region
        $region17: #{tpu_custom_call.1} parent=15 // pred_check
          %p138 = pneg %p55
        $region18: #{tpu_custom_call.1} parent=15 // pred_check_branch
          %140 = sbr.rel (%p138) target = $region20
        $region19: #{tpu_custom_call.1} parent=15 // pred_region
          %s141 = sand.u32 %s45, 1
          %s142 = scalar_lea.sflag [#allocation3], %s141
          %s143 = sand.u32 %s45, 1
          %s144 = smul.addr %s143, 16
          %s145 = scalar_lea.vmem [#allocation2], %s144
          %s146 = sadd.s32 %s24, %s25
          %p147 = scmp.lt.s32.totalorder %s146, 0
          %s148 = scalar_select %p147, %s146, 0
          %s149 = smul.u32 2, %s148
          %s151 = ssub.s32 256, 256
          %152 = vsyncadd %s142, %s151
          %s153 = smul.addr %s149, 128
          %s154 = scalar_lea.hbm %s0, %s153
          %s155 = sshll.u32 %s145, 4
          %s156 = int_to_ptr.vmem [resolvable:$true] %s155
          %161 = dma.hbm_to_vmem [thread:$0]  %s154, 256, %s156, %s142, 128, 128, 8
        $region20: #{tpu_custom_call.1} parent=15 // pred_fallthru
          _
        // Predicated region
        $region21: #{tpu_custom_call.1} parent=15 // pred_check
          %p162 = pneg %p87
        $region22: #{tpu_custom_call.1} parent=15 // pred_check_branch
          %164 = sbr.rel (%p162) target = $region24
        $region23: #{tpu_custom_call.1} parent=15 // pred_region
          %s165 = sand.u32 %s77, 1
          %s166 = scalar_lea.sflag [#allocation6], %s165
          %s167 = sand.u32 %s77, 1
          %s168 = smul.addr %s167, 4
          %s169 = scalar_lea.vmem [#allocation5], %s168
          %s170 = sadd.s32 %s24, %s25
          %p171 = scmp.lt.s32.totalorder %s170, 0
          %s172 = scalar_select %p171, %s170, 0
          %s173 = smul.u32 2, %s172
          %s175 = ssub.s32 64, 64
          %176 = vsyncadd %s166, %s175
          %s177 = smul.addr %s173, 32
          %s178 = scalar_lea.hbm %s1, %s177
          %s179 = sshll.u32 %s169, 4
          %s180 = int_to_ptr.vmem [resolvable:$true] %s179
          %185 = dma.hbm_to_vmem [thread:$0]  %s178, 64, %s180, %s166, 32, 32, 2
        $region24: #{tpu_custom_call.1} parent=15 // pred_fallthru
          _
      $region16: #{tpu_custom_call.1} parent=5 // pred_fallthru
        _
      %p186 = scmp.le.s32.totalorder 1, %s17
      %p187 = scmp.lt.s32.totalorder %s17, 3
      %p188 = pnand %p186, %p187
      %p189 = pneg %p188
      // Predicated region
      $region25: #{tpu_custom_call.1} parent=5 // pred_check
        _
      $region26: #{tpu_custom_call.1} parent=5 // pred_check_branch
        %191 = sbr.rel (%p188) target = $region28
      $region27: #{tpu_custom_call.1} parent=5 // pred_region
        %s192 = ssub.s32 %s17, 1
        %s193 = sand.u32 %s48, 1
        %s194 = scalar_lea.sflag [#allocation3], %s193
        %s195 = sand.u32 %s48, 1
        %s196 = smul.addr %s195, 16
        %s197 = scalar_lea.vmem [#allocation2], %s196
        // Predicated region
        $region29: #{tpu_custom_call.1} parent=27 // pred_check
          %p198 = pneg %p61
        $region30: #{tpu_custom_call.1} parent=27 // pred_check_branch
          %200 = sbr.rel (%p198) target = $region32
        $region31: #{tpu_custom_call.1} parent=27 // pred_region
          %201 = dma.done %s194, 256
        $region32: #{tpu_custom_call.1} parent=27 // pred_fallthru
          _
        %s202 = sand.u32 %s80, 1
        %s203 = scalar_lea.sflag [#allocation6], %s202
        %s204 = sand.u32 %s80, 1
        %s205 = smul.addr %s204, 4
        %s206 = scalar_lea.vmem [#allocation5], %s205
        // Predicated region
        $region33: #{tpu_custom_call.1} parent=27 // pred_check
          %p207 = pneg %p93
        $region34: #{tpu_custom_call.1} parent=27 // pred_check_branch
          %209 = sbr.rel (%p207) target = $region36
        $region35: #{tpu_custom_call.1} parent=27 // pred_region
          %210 = dma.done %s203, 64
        $region36: #{tpu_custom_call.1} parent=27 // pred_fallthru
          _
        %s211 = sand.u32 %s48, 1
        %s212 = scalar_lea.sflag [#allocation3], %s211
        %s213 = sand.u32 %s48, 1
        %s214 = smul.addr %s213, 16
        %s215 = scalar_lea.vmem [#allocation2], %s214
        %p216 = pneg %p61
        %p217 = pneg %p58
        %s218 = sand.u32 %s80, 1
        %s219 = scalar_lea.sflag [#allocation6], %s218
        %s220 = sand.u32 %s80, 1
        %s221 = smul.addr %s220, 4
        %s222 = scalar_lea.vmem [#allocation5], %s221
        %p223 = pneg %p93
        %p224 = pneg %p90
        %p225 = pneg %p119
        %p226 = pneg %p116
        %s227 = sand.u32 %s106, 1
        %s228 = scalar_lea.sflag [#allocation4], %s227
        %s229 = sand.u32 %s106, 1
        %s230 = smul.addr %s229, 8
        %s231 = scalar_lea.vmem [#allocation7], %s230
        %s232 = sadd.s32 %s26, %s27
        %p233 = scmp.lt.s32.totalorder %s232, 0
        %s234 = scalar_select %p233, %s232, 0
        %s235 = smul.u32 2, %s234
        %s236 = sadd.s32 %s26, %s27
        %p237 = scmp.lt.s32.totalorder %s236, 0
        %s238 = scalar_select %p237, %s236, 0
        %s239 = smul.u32 2, %s238
        %p240 = scmp.eq.s32.totalorder %s27, 0
        // Predicated region
        $region37: #{tpu_custom_call.1} parent=27 // pred_check
          %p241 = pneg %p240
        $region38: #{tpu_custom_call.1} parent=27 // pred_check_branch
          %243 = sbr.rel (%p241) target = $region40
        $region39: #{tpu_custom_call.1} parent=27 // pred_region
          %244 = vst [vmem:[%s231] sm:$0xff] 0.0
        $region40: #{tpu_custom_call.1} parent=27 // pred_fallthru
          _
        %v245 = vld [vmem:[%s197] sm:$0xff]
        %v246 = vld [vmem:[%s197 + $0x8] sm:$0xff]
        %v247 = vld [vmem:[%s206] sm:$0x3]
        %v248 = vld [vmem:[%s206 + $0x2] sm:$0x3]
        %v249 = vunpack.c.0.s8 %v247
        %v250 = vunpack.c.0.s8 %v248
        %vm251 = vcmp.eq.s32.totalorder %v249, 0
        %vm252 = vcmp.eq.s32.totalorder %v250, 0
        %v253 = vsub.f32 0.0, %v245
        %v254 = vsub.f32 0.0, %v246
        %v255 = vsel %vm251, %v245, %v253
        %v256 = vsel %vm252, %v246, %v254
        %v257 = vmax.f32 %v255, 0.0
        %v258 = vmax.f32 %v256, 0.0
        %v259 = vand.u32 2147483647, %v255
        %v260 = vand.u32 2147483647, %v256
        %v261 = vsub.f32 0.0, %v259
        %v262 = vsub.f32 0.0, %v260
        %v263 = vmul.f32 %v261, 1.442695
        %v264 = vpow.pop %v263
        %v265 = vmul.f32 %v262, 1.442695
        %v266 = vpow.pop %v265
        %v267 = vadd.f32 %v264, 1.0
        %v268 = vadd.f32 %v266, 1.0
        %v269 = vlog2.pop %v267
        %v270 = vmul.f32 %v269, 0.6931472
        %v271 = vlog2.pop %v268
        %v272 = vmul.f32 %v271, 0.6931472
        %v273 = vadd.f32 %v257, %v270
        %v274 = vadd.f32 %v258, %v272
        %s275 = sadd.s32 %s26, %s27
        %v276 = vlaneseq
        %v277 = vshrl.u32 %v276, 7
        %v278 = vadd.s32 %v277, 8
        %v279 = vlaneseq
        %v280 = vand.u32 %v279, 127
        %s281 = smul.u32 %s275, 16
        %v282 = vstv %s281
        %v283 = vadd.s32 %v282, %v277
        %v284 = vadd.s32 %v282, %v278
        %v285 = vmul.u32 %v283, 128
        %v286 = vmul.u32 %v284, 128
        %v287 = vadd.s32 %v285, %v280
        %v288 = vadd.s32 %v286, %v280
        %vm289 = vcmp.lt.s32.totalorder %v287, 2048
        %vm290 = vcmp.lt.s32.totalorder %v288, 2048
        %v291 = vsel %vm289, %v273, 0.0
        %v292 = vsel %vm290, %v274, 0.0
        %v293 = vld [vmem:[%s231] sm:$0xff]
        %v294 = vadd.f32 %v291, %v292
        %v295 = vadd.f32 %v293, %v294
        %296 = vst [vmem:[%s231] sm:$0xff] %v295
        %s297 = sand.u32 %s106, 1
        %s298 = scalar_lea.sflag [#allocation4], %s297
        %s299 = sand.u32 %s106, 1
        %s300 = smul.addr %s299, 8
        %s301 = scalar_lea.vmem [#allocation7], %s300
        // Predicated region
        $region41: #{tpu_custom_call.1} parent=27 // pred_check
          %p302 = pneg %p116
        $region42: #{tpu_custom_call.1} parent=27 // pred_check_branch
          %304 = sbr.rel (%p302) target = $region44
        $region43: #{tpu_custom_call.1} parent=27 // pred_region
          %s306 = ssub.s32 128, 128
          %307 = vsyncadd %s298, %s306
          %s308 = smul.addr %s26, 128
          %s309 = scalar_lea.hbm %s2, %s308
          %s311 = sshll.u32 %s301, 4
          %s312 = int_to_ptr.vmem [resolvable:$true] %s311
          %314 = dma.vmem_to_hbm [thread:$0]  %s312, 128, %s309, %s298
        $region44: #{tpu_custom_call.1} parent=27 // pred_fallthru
          _
      $region28: #{tpu_custom_call.1} parent=5 // pred_fallthru
        _
      %p315 = scmp.le.s32.totalorder 2, %s17
      // Predicated region
      $region45: #{tpu_custom_call.1} parent=5 // pred_check
        %p316 = pneg %p315
      $region46: #{tpu_custom_call.1} parent=5 // pred_check_branch
        %318 = sbr.rel (%p316) target = $region48
      $region47: #{tpu_custom_call.1} parent=5 // pred_region
        %s319 = ssub.s32 %s17, 2
        // Predicated region
        $region49: #{tpu_custom_call.1} parent=47 // pred_check
          %p320 = pneg %p122
        $region50: #{tpu_custom_call.1} parent=47 // pred_check_branch
          %322 = sbr.rel (%p320) target = $region52
        $region51: #{tpu_custom_call.1} parent=47 // pred_region
          %s323 = sand.u32 %s107, 1
          %s324 = scalar_lea.sflag [#allocation4], %s323
          %s325 = sand.u32 %s107, 1
          %s326 = smul.addr %s325, 8
          %s327 = scalar_lea.vmem [#allocation7], %s326
          %328 = dma.done %s324, 128
        $region52: #{tpu_custom_call.1} parent=47 // pred_fallthru
          _
      $region48: #{tpu_custom_call.1} parent=5 // pred_fallthru
        _
    $region6: #{tpu_custom_call.1} parent=1 // loop_footer
      %s21 = sadd.s32 1, %s17
    $region7: #{tpu_custom_call.1} parent=1 // loop_footer_branch
      %16 = sbr.rel target = $region3
    $region8: #{tpu_custom_call.1} parent=1 // loop_exit
      _
    %329 = vsyncpa [#allocation3], 1
    %s330 = scalar_lea.sflag [#allocation3], 1
    %331 = vsyncpa %s330, 1
    %332 = vsyncpa [#allocation6], 1
    %s333 = scalar_lea.sflag [#allocation6], 1
    %334 = vsyncpa %s333, 1
    %335 = vsyncpa [#allocation4], 1
    %s336 = scalar_lea.sflag [#allocation4], 1
    %337 = vsyncpa %s336, 1

</llo_original>
